<compile_context>
chip_gen: v7x
topology: tpu7x:2x2x1
jax: 0.10.0
libtpu: 0.0.40
codegen_flags: <defaults>
</compile_context>

<pallas_src>
import functools
import math

import jax
import jax.numpy as jnp
import numpy as np
from jax import lax
from jax.experimental import pallas as pl
from jax.experimental.pallas import tpu as pltpu


def _pick_tile(dim, cap, align):
    """Largest tile <= cap that is a multiple of `align` and divides `dim`,
    falling back to the full dimension (full-dim blocks are exempt from the
    (8,128) divisibility rule).  Avoids any jnp.pad / output-slice copies."""
    if dim <= cap:
        return dim
    t = (cap // align) * align
    while t >= align:
        if dim % t == 0:
            return t
        t -= align
    return dim


@functools.lru_cache(maxsize=None)
def _vmem_limit_bytes():
    """Per-generation scoped-VMEM budget (~72% of physical); 32 MiB fallback."""
    try:
        cap = getattr(pltpu.get_tpu_info(), "vmem_capacity_bytes", None)
        if cap:
            return int(min(96 * 1024 * 1024, cap * 0.72))
    except Exception:
        pass
    return 32 * 1024 * 1024


# ----------------------------------------------------------------------------
# Tiled matmul kernel (used for in_proj and out_proj)
# ----------------------------------------------------------------------------
def _matmul_kernel(x_ref, w_ref, o_ref, acc_ref):
    @pl.when(pl.program_id(2) == 0)
    def _():
        acc_ref[...] = jnp.zeros_like(acc_ref)

    acc_ref[...] += jnp.dot(x_ref[...], w_ref[...],
                            preferred_element_type=jnp.float32)

    @pl.when(pl.program_id(2) == pl.num_programs(2) - 1)
    def _():
        o_ref[...] = acc_ref[...].astype(o_ref.dtype)


def pallas_matmul(x, w, out_dtype=jnp.float32, tm=512, tn=512, tk=512):
    """out = x @ w with bf16 MXU operands and an f32 VMEM accumulator.
    Tiles are chosen to divide (or fully cover) each dim -> no padding copies."""
    M, K = x.shape
    K2, N = w.shape
    assert K == K2
    x = x.astype(jnp.bfloat16)
    w = w.astype(jnp.bfloat16)

    tm = _pick_tile(M, tm, 16)     # bf16 sublane packing on the M axis
    tn = _pick_tile(N, tn, 128)
    tk = _pick_tile(K, tk, 128)

    return pl.pallas_call(
        _matmul_kernel,
        grid_spec=pltpu.PrefetchScalarGridSpec(
            num_scalar_prefetch=0,
            grid=(M // tm, N // tn, K // tk),
            in_specs=[
                pl.BlockSpec((tm, tk), lambda i, j, k: (i, k)),
                pl.BlockSpec((tk, tn), lambda i, j, k: (k, j)),
            ],
            out_specs=pl.BlockSpec((tm, tn), lambda i, j, k: (i, j)),
            scratch_shapes=[pltpu.VMEM((tm, tn), jnp.float32)],
        ),
        out_shape=jax.ShapeDtypeStruct((M, N), out_dtype),
        compiler_params=pltpu.CompilerParams(
            dimension_semantics=("parallel", "parallel", "arbitrary"),
            vmem_limit_bytes=_vmem_limit_bytes(),
        ),
    )(x, w)


# ----------------------------------------------------------------------------
# Fused conv1d + chunked SSD scan + gating kernel.
# Grid = (batch, time-chunks); conv tail + SSM state carried in VMEM scratch.
# ----------------------------------------------------------------------------
def _make_mamba2_kernel(chunk, K, d_conv, d_inner, n_v_heads, n_qk_heads, d_state):
    hd = d_inner // n_v_heads
    ratio = n_v_heads // n_qk_heads
    gw = ratio * hd            # lane width handled per qk-group
    PAD = 8                    # sublane-aligned offset of the chunk in the conv window
    bf16 = jnp.bfloat16
    BIG = 1e30                 # "infinite" decay distance for masked entries

    def kernel(xbc_ref, zA_ref, w_ref, cb_ref, D_ref, zb_ref, o_ref,
               buf_ref, S_ref, y_ref):
        # buf_ref : (chunk + 8, d_conv) f32  conv window (tail rows PAD-K+1..PAD-1)
        # S_ref   : (d_state, d_inner)  f32  carried SSM state, heads along lanes
        # y_ref   : (chunk, d_inner)    f32  lane-dense per-chunk y accumulator
        c_idx = pl.program_id(1)

        # ---- conv-tail / SSM-state init & carry ------------------------------
        @pl.when(c_idx == 0)
        def _():
            buf_ref[0:PAD, :] = jnp.zeros((PAD, d_conv), jnp.float32)
            S_ref[...] = jnp.zeros_like(S_ref)

        @pl.when(c_idx != 0)
        def _():
            # last K-1 raw rows of the previous chunk become the causal tail
            buf_ref[PAD - (K - 1):PAD, :] = \
                buf_ref[PAD + chunk - (K - 1):PAD + chunk, :]

        # current chunk lands sublane-aligned at row PAD (one unmasked store)
        buf_ref[PAD:PAD + chunk, :] = xbc_ref[0].astype(jnp.float32)

        # ---- causal depthwise conv1d + SiLU ----------------------------------
        xwin = buf_ref[...]                                   # (chunk + PAD, d_conv)
        acc = jnp.zeros((chunk, d_conv), jnp.float32) + cb_ref[...]
        for k in range(K):
            off = PAD - (K - 1) + k                           # static tap offset
            acc = acc + xwin[off:off + chunk, :] * w_ref[k:k + 1, :]
        xbc_act = acc * jax.nn.sigmoid(acc)                   # SiLU (f32)

        x_all = xbc_act[:, :d_inner]                                  # (chunk, d_inner)
        Bm = xbc_act[:, d_inner:d_inner + n_qk_heads * d_state]       # (chunk, n_qk*S)
        Cm = xbc_act[:, d_inner + n_qk_heads * d_state:]              # (chunk, n_qk*S)

        zA = zA_ref[0]                                        # (chunk, d_inner + n_v) f32
        z = zA[:, :d_inner]
        A_log = zA[:, d_inner:]                               # (chunk, n_v)

        # ---- chunked SSD (A = -1, dt = softplus(A_log), x pre-divided by dt) --
        # y[t] = sum_{s<=t} exp(-(cum[t]-cum[s])) (C_t.B_s) x[s]   (intra-chunk)
        #      + exp(-lcum[t]) C_t . S_prev                         (inter-chunk)
        # S_new = exp(-total) S_prev + sum_s exp(-(total-lcum[s])) B_s (x) x[s]
        dt = jax.nn.softplus(A_log)                           # (chunk, n_v) f32

        row = lax.broadcasted_iota(jnp.int32, (chunk, chunk), 0)
        col = lax.broadcasted_iota(jnp.int32, (chunk, chunk), 1)
        causal = row >= col
        tril = causal.astype(jnp.float32)

        # within-chunk inclusive cumsums (tiny f32 MXU work at chunk <= 256)
        lcum = jnp.dot(tril, dt, preferred_element_type=jnp.float32)      # (chunk, n_v)
        lcum_t = lax.dot_general(dt, tril, (((0,), (1,)), ((), ())),
                                 preferred_element_type=jnp.float32)      # (n_v, chunk)
        total = lcum[chunk - 1:chunk, :]                                  # (1, n_v)

        for g in range(n_qk_heads):
            h0 = g * ratio
            lo = h0 * hd
            Bh = Bm[:, g * d_state:(g + 1) * d_state].astype(bf16)        # (chunk, S)
            Ch = Cm[:, g * d_state:(g + 1) * d_state].astype(bf16)        # (chunk, S)
            x_g = x_all[:, lo:lo + gw]                                    # (chunk, gw)
            lcum_g = lcum[:, h0:h0 + ratio]                               # (chunk, ratio)
            lcumT_g = lcum_t[h0:h0 + ratio, :]                            # (ratio, chunk)
            total_g = total[:, h0:h0 + ratio]                             # (1, ratio)
            S_old = S_ref[:, lo:lo + gw]                                  # (d_state, gw)

            # Gram matrix: ONCE per qk group, shared by its `ratio` v-heads.
            G = lax.dot_general(Ch, Bh, (((1,), (1,)), ((), ())),
                                preferred_element_type=jnp.float32)       # (chunk, chunk)
            # inter-chunk contribution, batched over the group's heads.
            cs = jnp.dot(Ch, S_old.astype(bf16),
                         preferred_element_type=jnp.float32)              # (chunk, gw)

            y_parts, wx_parts, sdec_parts = [], [], []
            for r in range(ratio):
                lc = lcum_g[:, r:r + 1]                                   # (chunk, 1)
                tot = total_g[:, r:r + 1]                                 # (1, 1)
                x_h = x_g[:, r * hd:(r + 1) * hd]                         # (chunk, hd)

                # intra-chunk quadratic form (mask BEFORE exp: no overflow)
                diff = lc - lcumT_g[r:r + 1, :]                           # cum[t]-cum[s]
                decay = jnp.exp(-jnp.where(causal, diff, BIG))
                Mh = (G * decay).astype(bf16)
                y_h = jnp.dot(Mh, x_h.astype(bf16),
                              preferred_element_type=jnp.float32)         # (chunk, hd)

                y_parts.append(y_h + jnp.exp(-lc) * cs[:, r * hd:(r + 1) * hd])
                wx_parts.append(jnp.exp(-(tot - lc)) * x_h)
                sdec_parts.append(jnp.exp(-tot) * S_old[:, r * hd:(r + 1) * hd])

            wx = wx_parts[0] if ratio == 1 else jnp.concatenate(wx_parts, axis=1)
            y_in = y_parts[0] if ratio == 1 else jnp.concatenate(y_parts, axis=1)
            sdec = sdec_parts[0] if ratio == 1 else jnp.concatenate(sdec_parts, axis=1)

            # state update batched over the group (wider MXU output,
            # lane-dense gw-wide stores into the carried state / y accumulator)
            bx = lax.dot_general(Bh, wx.astype(bf16), (((0,), (0,)), ((), ())),
                                 preferred_element_type=jnp.float32)      # (d_state, gw)
            S_ref[:, lo:lo + gw] = sdec + bx
            y_ref[:, lo:lo + gw] = y_in

        # ---- D skip + SiLU(z + z_bias) gating: one lane-dense store ----------
        y = y_ref[...] + x_all * D_ref[...]
        gate_in = z + zb_ref[...]
        gate = gate_in * jax.nn.sigmoid(gate_in)
        o_ref[0, :, :] = (y * gate).astype(o_ref.dtype)

    return kernel


# ----------------------------------------------------------------------------
# Full forward pass (glue in JAX, hot path in Pallas)
# ----------------------------------------------------------------------------
def discrete_mamba2_forward(hidden_states, params, cfg):
    B, L, d_model = hidden_states.shape
    d_inner = cfg["d_inner"]
    d_state = cfg["d_state"]
    n_qk = cfg["n_qk_heads"]
    n_v = cfg["n_v_heads"]
    K = cfg["conv_kernel_size"]
    chunk = cfg["chunk_size"]
    d_conv = d_inner + 2 * n_qk * d_state
    assert chunk % 16 == 0, "chunk_size must be a multiple of 16 (bf16 sublane packing)"
    assert K <= 8, "conv tail must fit in the 8-row aligned pad of the conv window"
    assert d_inner % n_v == 0 and n_v % n_qk == 0

    Lp = (1 + (L - 1) // chunk) * chunk
    n_chunks = Lp // chunk
    u = jnp.pad(hidden_states, ((0, 0), (0, Lp - L), (0, 0)))

    # in_proj with the weight pre-split at init (no bias: add_bias_linear=False).
    # Two matmuls -> no XLA lane-slice copies of a fused xBCzA intermediate.
    # xBC is stored bf16 (halves the HBM round trip of the largest activation);
    # z / A_log stay f32 so softplus and the decay exponents keep full precision.
    u_bf = u.reshape(B * Lp, d_model).astype(jnp.bfloat16)
    xBC = pallas_matmul(u_bf, params["W_in_xbc"],
                        out_dtype=jnp.bfloat16).reshape(B, Lp, d_conv)
    zA = pallas_matmul(u_bf, params["W_in_za"],
                       out_dtype=jnp.float32).reshape(B, Lp, d_inner + n_v)

    # Per-step VMEM (double-buffered inputs + scratch) ~
    #   2*chunk*d_conv*2 + 2*chunk*(d_inner+n_v)*4 + (chunk+8)*d_conv*4
    #   + d_state*d_inner*4 + chunk*d_inner*4 + 2*chunk*d_inner*2 bytes.
    # Keep chunk at 128-256 on v7x (64 MiB physical VMEM).
    kernel = _make_mamba2_kernel(chunk, K, d_conv, d_inner, n_v, n_qk, d_state)
    gated = pl.pallas_call(
        kernel,
        grid_spec=pltpu.PrefetchScalarGridSpec(
            num_scalar_prefetch=0,
            grid=(B, n_chunks),
            in_specs=[
                pl.BlockSpec((1, chunk, d_conv), lambda b, c: (b, c, 0)),
                pl.BlockSpec((1, chunk, d_inner + n_v), lambda b, c: (b, c, 0)),
                pl.BlockSpec((K, d_conv), lambda b, c: (0, 0)),
                pl.BlockSpec((1, d_conv), lambda b, c: (0, 0)),
                pl.BlockSpec((1, d_inner), lambda b, c: (0, 0)),
                pl.BlockSpec((1, d_inner), lambda b, c: (0, 0)),
            ],
            out_specs=pl.BlockSpec((1, chunk, d_inner), lambda b, c: (b, c, 0)),
            scratch_shapes=[
                pltpu.VMEM((chunk + 8, d_conv), jnp.float32),   # aligned conv window
                pltpu.VMEM((d_state, d_inner), jnp.float32),    # carried SSM state
                pltpu.VMEM((chunk, d_inner), jnp.float32),      # y accumulator
            ],
        ),
        out_shape=jax.ShapeDtypeStruct((B, Lp, d_inner), jnp.bfloat16),
        compiler_params=pltpu.CompilerParams(
            dimension_semantics=("parallel", "arbitrary"),
            vmem_limit_bytes=_vmem_limit_bytes(),
        ),
    )(xBC, zA, params["conv_w"], params["conv_b"], params["D_full"], params["z_bias"])

    out = pallas_matmul(gated.reshape(B * Lp, d_inner), params["W_out"],
                        out_dtype=jnp.float32).reshape(B, Lp, d_model)
    return out[:, :L, :]


# ----------------------------------------------------------------------------
# Pure-JAX reference (naive sequential SSM scan) for correctness checking.
# Mirrors the kernel's bf16 storage / MXU-operand rounding.
# ----------------------------------------------------------------------------
def ref_forward(hidden_states, params, cfg):
    B, L, d_model = hidden_states.shape
    d_inner = cfg["d_inner"]
    d_state = cfg["d_state"]
    n_qk = cfg["n_qk_heads"]
    n_v = cfg["n_v_heads"]
    K = cfg["conv_kernel_size"]
    chunk = cfg["chunk_size"]
    hd = d_inner // n_v
    ratio = n_v // n_qk
    d_conv = d_inner + 2 * n_qk * d_state

    Lp = (1 + (L - 1) // chunk) * chunk
    u = jnp.pad(hidden_states, ((0, 0), (0, Lp - L), (0, 0)))
    u_bf = u.reshape(B * Lp, d_model).astype(jnp.bfloat16)
    xBC = jnp.dot(u_bf, params["W_in_xbc"], preferred_element_type=jnp.float32)
    xBC = xBC.astype(jnp.bfloat16).astype(jnp.float32).reshape(B, Lp, d_conv)
    zA = jnp.dot(u_bf, params["W_in_za"],
                 preferred_element_type=jnp.float32).reshape(B, Lp, d_inner + n_v)
    z = zA[..., :d_inner]
    A_log = zA[..., d_inner:]

    xBC_pad = jnp.pad(xBC, ((0, 0), (K - 1, 0), (0, 0)))
    conv = sum(xBC_pad[:, k:k + Lp, :] * params["conv_w"][k] for k in range(K))
    conv = conv + params["conv_b"][0]
    act = jax.nn.silu(conv)
    scan_in = act.astype(jnp.bfloat16).astype(jnp.float32)   # mirror bf16 MXU operands

    x = scan_in[..., :d_inner].reshape(B, Lp, n_v, hd)
    Bm = scan_in[..., d_inner:d_inner + n_qk * d_state].reshape(B, Lp, n_qk, d_state)
    Cm = scan_in[..., d_inner + n_qk * d_state:].reshape(B, Lp, n_qk, d_state)
    dt = jax.nn.softplus(A_log)                              # (B, Lp, n_v)

    # sequential scan: S_t = exp(-dt_t) S_{t-1} + B_t (x) x_t ; y_t = C_t . S_t
    S = jnp.zeros((B, n_v, d_state, hd), jnp.float32)
    ys = []
    for t in range(Lp):
        Bv = jnp.repeat(Bm[:, t], ratio, axis=1)
        Cv = jnp.repeat(Cm[:, t], ratio, axis=1)
        decay = jnp.exp(-dt[:, t])                           # A = -1
        S = decay[..., None, None] * S + Bv[..., :, None] * x[:, t][..., None, :]
        ys.append(jnp.einsum("bhn,bhnp->bhp", Cv, S))
    y = jnp.stack(ys, axis=1)                                # (B, Lp, n_v, hd)

    x_f32 = act[..., :d_inner].reshape(B, Lp, n_v, hd)
    Du = params["D"][None, None, :, None] * x_f32
    y = (y + Du).reshape(B, Lp, d_inner)
    gated = (y * jax.nn.silu(z + params["z_bias"][0])).astype(jnp.bfloat16)
    out = jnp.dot(gated.reshape(B * Lp, d_inner), params["W_out"],
                  preferred_element_type=jnp.float32).reshape(B, Lp, d_model)
    return out[:, :L, :]


# ----------------------------------------------------------------------------
# Deterministic parameter init (shapes follow DiscreteMamba2.__init__)
# ----------------------------------------------------------------------------
def init_params(key, cfg):
    d_model = cfg["d_model"]
    d_inner = cfg["d_inner"]
    d_state = cfg["d_state"]
    n_qk = cfg["n_qk_heads"]
    n_v = cfg["n_v_heads"]
    K = cfg["conv_kernel_size"]
    hd = d_inner // n_v
    d_conv = d_inner + 2 * n_qk * d_state
    d_inner_proj = d_conv + d_inner + n_v

    k1, k2, k3, k4 = jax.random.split(key, 4)
    W_in = jax.random.normal(k1, (d_model, d_inner_proj), jnp.float32) / math.sqrt(d_model)
    bound_w = 1.0 / math.sqrt(d_conv * K)
    conv_w = jax.random.uniform(k2, (K, d_conv), jnp.float32, -bound_w, bound_w)
    bound_b = 1.0 / math.sqrt(K)  # fan_in of the depthwise (d_conv, 1, K) weight is K
    conv_b = jax.random.uniform(k3, (1, d_conv), jnp.float32, -bound_b, bound_b)
    D = jnp.ones((n_v,), jnp.float32)        # n_qk_heads == n_v_heads in this config
    z_bias = jnp.zeros((1, d_inner), jnp.float32)
    W_out = jax.random.normal(k4, (d_inner, d_model), jnp.float32) / math.sqrt(d_inner)
    return dict(
        # in_proj weight pre-split (xBC | z,A_log) and pre-cast to bf16 at init so
        # the forward pass never slices activations nor re-casts/pads weights.
        W_in_xbc=W_in[:, :d_conv].astype(jnp.bfloat16),
        W_in_za=W_in[:, d_conv:].astype(jnp.bfloat16),
        W_out=W_out.astype(jnp.bfloat16),
        conv_w=conv_w, conv_b=conv_b, D=D,
        D_full=jnp.repeat(D, hd)[None, :], z_bias=z_bias,
    )


if __name__ == "__main__":
    cfg = dict(
        d_model=32, d_inner=32, d_state=16,
        n_qk_heads=4, n_v_heads=4,
        conv_kernel_size=4, chunk_size=16,
    )
    key = jax.random.PRNGKey(0)
    k_p, k_x = jax.random.split(key)
    params = init_params(k_p, cfg)

    # L=29 with chunk=16 -> padded_len=32, 2 time-chunks: exercises both the
    # cross-chunk state / conv-tail carry and the tail-padding path.
    B, L = 2, 29
    hidden_states = jax.random.normal(k_x, (B, L, cfg["d_model"]), jnp.float32)

    out = discrete_mamba2_forward(hidden_states, params, cfg)
    out = jax.block_until_ready(out)
    assert out.shape == (B, L, cfg["d_model"])

    ref = ref_forward(hidden_states, params, cfg)
    np.testing.assert_allclose(np.asarray(out), np.asarray(ref), rtol=3e-2, atol=3e-2)

    print("KERNEL_OK")
</pallas_src>

<mosaic_0001>
module attributes {stable_mosaic.version = 11 : i64} {
  func.func @_matmul_kernel(%arg0: i32, %arg1: i32, %arg2: i32, %arg3: memref<64x32xbf16, #tpu.memory_space<vmem>>, %arg4: memref<32x160xbf16, #tpu.memory_space<vmem>>, %arg5: memref<64x160xbf16, #tpu.memory_space<vmem>>, %arg6: memref<64x160xf32, #tpu.memory_space<vmem>>) attributes {dimension_semantics = [#tpu.dimension_semantics<parallel>, #tpu.dimension_semantics<parallel>, #tpu.dimension_semantics<arbitrary>], iteration_bounds = array<i64: 1, 1, 1>, scalar_prefetch = 0 : i64, scratch_operands = 1 : i64, tpu.core_type = #tpu.core_type<tc>, window_params = [{transform_indices = @transform_0, window_bounds = array<i64: 64, 32>}, {transform_indices = @transform_1, window_bounds = array<i64: 32, 160>}, {transform_indices = @transform_2, window_bounds = array<i64: 64, 160>}]} {
    %c0_i32 = arith.constant 0 : i32
    %0 = arith.cmpi eq, %arg2, %c0_i32 : i32
    %1 = arith.extui %0 : i1 to i32
    %c0_i32_0 = arith.constant 0 : i32
    %2 = arith.cmpi ne, %1, %c0_i32_0 : i32
    scf.if %2 {
      %cst_10 = arith.constant 0.000000e+00 : f32
      %12 = vector.broadcast %cst_10 : f32 to vector<64x160xf32>
      %c0_11 = arith.constant 0 : index
      %c0_12 = arith.constant 0 : index
      %13 = vector.load %arg6[%c0_11, %c0_12] : memref<64x160xf32, #tpu.memory_space<vmem>>, vector<64x160xf32>
      tpu.vector_store %arg6[%c0_11, %c0_12], %12 {strides = array<i32>} : memref<64x160xf32, #tpu.memory_space<vmem>>, vector<64x160xf32>,
    } else {
    }
    %c0 = arith.constant 0 : index
    %c0_1 = arith.constant 0 : index
    %3 = vector.load %arg6[%c0, %c0_1] : memref<64x160xf32, #tpu.memory_space<vmem>>, vector<64x160xf32>
    %c0_2 = arith.constant 0 : index
    %c0_3 = arith.constant 0 : index
    %4 = vector.load %arg3[%c0_2, %c0_3] : memref<64x32xbf16, #tpu.memory_space<vmem>>, vector<64x32xbf16>
    %c0_4 = arith.constant 0 : index
    %c0_5 = arith.constant 0 : index
    %5 = vector.load %arg4[%c0_4, %c0_5] : memref<32x160xbf16, #tpu.memory_space<vmem>>, vector<32x160xbf16>
    %cst = arith.constant dense<0.000000e+00> : vector<64x160xf32>
    %6 = tpu.matmul %4, %5, %cst {dimension_numbers = #tpu.dot_dimension_numbers<[1], [0], [0], [1], [0, 0, 1, 1], [], []>} : vector<64x32xbf16>, vector<32x160xbf16>, vector<64x160xf32> -> vector<64x160xf32>
    %7 = arith.addf %3, %6 : vector<64x160xf32>
    %c0_6 = arith.constant 0 : index
    %c0_7 = arith.constant 0 : index
    %8 = vector.load %arg6[%c0_6, %c0_7] : memref<64x160xf32, #tpu.memory_space<vmem>>, vector<64x160xf32>
    tpu.vector_store %arg6[%c0_6, %c0_7], %7 {strides = array<i32>} : memref<64x160xf32, #tpu.memory_space<vmem>>, vector<64x160xf32>,
    %c0_i32_8 = arith.constant 0 : i32
    %9 = arith.cmpi eq, %arg2, %c0_i32_8 : i32
    %10 = arith.extui %9 : i1 to i32
    %c0_i32_9 = arith.constant 0 : i32
    %11 = arith.cmpi ne, %10, %c0_i32_9 : i32
    scf.if %11 {
      %c0_10 = arith.constant 0 : index
      %c0_11 = arith.constant 0 : index
      %12 = vector.load %arg6[%c0_10, %c0_11] : memref<64x160xf32, #tpu.memory_space<vmem>>, vector<64x160xf32>
      %13 = arith.truncf %12 : vector<64x160xf32> to vector<64x160xbf16>
      %c0_12 = arith.constant 0 : index
      %c0_13 = arith.constant 0 : index
      %14 = vector.load %arg5[%c0_12, %c0_13] : memref<64x160xbf16, #tpu.memory_space<vmem>>, vector<64x160xbf16>
      tpu.vector_store %arg5[%c0_12, %c0_13], %13 {strides = array<i32>} : memref<64x160xbf16, #tpu.memory_space<vmem>>, vector<64x160xbf16>,
    } else {
    }
    return
  }
  func.func @transform_0(%arg0: i32, %arg1: i32, %arg2: i32) -> (i32, i32) {
    %c0_i32 = arith.constant 0 : i32
    return %arg0, %arg2 : i32, i32
  }
  func.func @transform_1(%arg0: i32, %arg1: i32, %arg2: i32) -> (i32, i32) {
    %c0_i32 = arith.constant 0 : i32
    return %arg2, %arg1 : i32, i32
  }
  func.func @transform_2(%arg0: i32, %arg1: i32, %arg2: i32) -> (i32, i32) {
    %c0_i32 = arith.constant 0 : i32
    return %arg0, %arg1 : i32, i32
  }
}

</mosaic_0001>

<llo_original>
// kernel: tpu_custom_call.1
$region0: #{tpu_custom_call.1}
  #allocation0 [shape = 'u32[]', space=smem, size = 0x4, offset = 0x4, fixed_abs, tag = 'smem constant byte address 0x4 - core index']
  #allocation1 [shape = 'u32[144,128]{1,0:T(1,128)}', space=vmem, size = 0x12000, scoped, tag = 'internal scratch']
  #allocation2 [shape = 'f32[64,160]{1,0:T(8,128)}', space=vmem, size = 0x10000, scoped, tag = 'scratch operand']
  %s0 = inlined_call_operand.vmem [shape: bf16[64,32], index: 0, kind: input, shape index: {}]
  %s1 = inlined_call_operand.vmem [shape: bf16[32,160], index: 1, kind: input, shape index: {}]
  %s2 = inlined_call_operand.hbm [shape: bf16[64,160], index: 2, kind: output, shape index: {}]
  %s3 = sld [smem:[#allocation0]]
  $region26: #{tpu_custom_call.1} parent=0
    _
  %s5 = ssub.s32 1, %s3
  %s6 = scalar_select 0, %s5, %s3
  $region1: #{tpu_custom_call.1} parent=0
    #allocation3 [shape = 'u8[32768]{0}', space=vmem, size = 0x8000, scoped, tag = 'output window, operand 0, single buffered']
    #allocation4 [shape = 's32[1]{0}', space=sflag, size = 0x4, scoped, tag = 'scoped memory for tpu_custom_call.1']
    %7 = vsyncpa [#allocation4], 0
    // Predicated region
    $region2: #{tpu_custom_call.1} parent=1 // pred_check
      _
    $region3: #{tpu_custom_call.1} parent=1 // pred_check_branch
      %9 = sbr.rel (0) target = $region5
    $region4: #{tpu_custom_call.1} parent=1 // pred_region
      _
    $region5: #{tpu_custom_call.1} parent=1 // pred_fallthru
      _
    // Predicated region
    $region6: #{tpu_custom_call.1} parent=1 // pred_check
      _
    $region7: #{tpu_custom_call.1} parent=1 // pred_check_branch
      %11 = sbr.rel (0) target = $region9
    $region8: #{tpu_custom_call.1} parent=1 // pred_region
      _
    $region9: #{tpu_custom_call.1} parent=1 // pred_fallthru
      _
    %p13 = scmp.eq.s32.totalorder 0, 0
    // Predicated region
    $region10: #{tpu_custom_call.1} parent=1 // pred_check
      %p14 = pneg %p13
    $region11: #{tpu_custom_call.1} parent=1 // pred_check_branch
      %16 = sbr.rel (%p14) target = $region13
    $region12: #{tpu_custom_call.1} parent=1 // pred_region
      %17 = vst [vmem:[#allocation2] sm:$0xff] 0.0
      %vm18 = vcmask 261120
      %19 = vst.msk [vmem:[#allocation2 + $0x8] sm:$0xff] %vm18, 0.0
      %20 = vst [vmem:[#allocation2 + $0x10] sm:$0xff] 0.0
      %21 = vst.msk [vmem:[#allocation2 + $0x18] sm:$0xff] %vm18, 0.0
      %22 = vst [vmem:[#allocation2 + $0x20] sm:$0xff] 0.0
      %23 = vst.msk [vmem:[#allocation2 + $0x28] sm:$0xff] %vm18, 0.0
      %24 = vst [vmem:[#allocation2 + $0x30] sm:$0xff] 0.0
      %25 = vst.msk [vmem:[#allocation2 + $0x38] sm:$0xff] %vm18, 0.0
      %26 = vst [vmem:[#allocation2 + $0x40] sm:$0xff] 0.0
      %27 = vst.msk [vmem:[#allocation2 + $0x48] sm:$0xff] %vm18, 0.0
      %28 = vst [vmem:[#allocation2 + $0x50] sm:$0xff] 0.0
      %29 = vst.msk [vmem:[#allocation2 + $0x58] sm:$0xff] %vm18, 0.0
      %30 = vst [vmem:[#allocation2 + $0x60] sm:$0xff] 0.0
      %31 = vst.msk [vmem:[#allocation2 + $0x68] sm:$0xff] %vm18, 0.0
      %32 = vst [vmem:[#allocation2 + $0x70] sm:$0xff] 0.0
      %33 = vst.msk [vmem:[#allocation2 + $0x78] sm:$0xff] %vm18, 0.0
    $region13: #{tpu_custom_call.1} parent=1 // pred_fallthru
      _
    %v34 = vld [vmem:[#allocation2] sm:$0xff]
    %v35 = vld [vmem:[#allocation2 + $0x8] sm:$0xff]
    %v36 = vld [vmem:[#allocation2 + $0x10] sm:$0xff]
    %v37 = vld [vmem:[#allocation2 + $0x18] sm:$0xff]
    %v38 = vld [vmem:[#allocation2 + $0x20] sm:$0xff]
    %v39 = vld [vmem:[#allocation2 + $0x28] sm:$0xff]
    %v40 = vld [vmem:[#allocation2 + $0x30] sm:$0xff]
    %v41 = vld [vmem:[#allocation2 + $0x38] sm:$0xff]
    %v42 = vld [vmem:[#allocation2 + $0x40] sm:$0xff]
    %v43 = vld [vmem:[#allocation2 + $0x48] sm:$0xff]
    %v44 = vld [vmem:[#allocation2 + $0x50] sm:$0xff]
    %v45 = vld [vmem:[#allocation2 + $0x58] sm:$0xff]
    %v46 = vld [vmem:[#allocation2 + $0x60] sm:$0xff]
    %v47 = vld [vmem:[#allocation2 + $0x68] sm:$0xff]
    %v48 = vld [vmem:[#allocation2 + $0x70] sm:$0xff]
    %v49 = vld [vmem:[#allocation2 + $0x78] sm:$0xff]
    %v50 = vld [vmem:[%s0] sm:$0xf]
    %v51 = vld [vmem:[%s0 + $0x4] sm:$0xf]
    %v52 = vld [vmem:[%s0 + $0x8] sm:$0xf]
    %v53 = vld [vmem:[%s0 + $0xc] sm:$0xf]
    %v54 = vld [vmem:[%s0 + $0x10] sm:$0xf]
    %v55 = vld [vmem:[%s0 + $0x14] sm:$0xf]
    %v56 = vld [vmem:[%s0 + $0x18] sm:$0xf]
    %v57 = vld [vmem:[%s0 + $0x1c] sm:$0xf]
    %v58 = vld [vmem:[%s1] sm:$0xff]
    %v59 = vld [vmem:[%s1 + $0x8] sm:$0xff]
    %v60 = vld [vmem:[%s1 + $0x10] sm:$0xff]
    %v61 = vld [vmem:[%s1 + $0x18] sm:$0xff]
    %v70 = vunpack.c.l.b16 %v50
    %v71 = vunpack.c.l.b16 %v51
    %v72 = vunpack.c.l.b16 %v52
    %v73 = vunpack.c.l.b16 %v53
    %v74 = vunpack.c.l.b16 %v54
    %v75 = vunpack.c.l.b16 %v55
    %v76 = vunpack.c.l.b16 %v56
    %v77 = vunpack.c.l.b16 %v57
    %v78 = vpack.c.b16 %v71, %v70
    %v79 = vpack.c.b16 %v73, %v72
    %v80 = vpack.c.b16 %v75, %v74
    %v81 = vpack.c.b16 %v77, %v76
    %v86 = vunpack.c.l.b16 %v58
    %v87 = vunpack.c.h.b16 %v58
    %v88 = vunpack.c.l.b16 %v59
    %v89 = vunpack.c.h.b16 %v59
    %v90 = vunpack.c.l.b16 %v60
    %v91 = vunpack.c.h.b16 %v60
    %v92 = vunpack.c.l.b16 %v61
    %v93 = vunpack.c.h.b16 %v61
    %v94 = vpack.c.b16 %v88, %v86
    %v95 = vpack.c.b16 %v89, %v87
    %v96 = vpack.c.b16 %v92, %v90
    %v97 = vpack.c.b16 %v93, %v91
    %vm102 = vcmask 261120
    %v104 = vsel %vm102, %v78, 0
    %v107 = vsel %vm102, %v79, 0
    %v110 = vsel %vm102, %v80, 0
    %v113 = vsel %vm102, %v81, 0
    %115 = vmatprep.subr.bf16.mxu0 %v95
    %116 = vmatpush1.bf16.msra.mxu0 %v94
    %117 = vmatprep.subr.bf16.mxu0 %v97
    %118 = vmatpush1.bf16.msra.mxu0 %v96
    %119 = vmatprep.subr.bf16.mxu0 0
    %120 = vmatpush1.bf16.msra.mxu0 0
    %121 = vmatprep.subr.bf16.mxu0 0
    %122 = vmatpush1.bf16.msra.mxu0 0
    %123 = vmatprep.subr.bf16.mxu0 0
    %124 = vmatpush1.bf16.msra.mxu0 0
    %125 = vmatprep.subr.bf16.mxu0 0
    %126 = vmatpush1.bf16.msra.mxu0 0
    %127 = vmatprep.subr.bf16.mxu0 0
    %128 = vmatpush1.bf16.msra.mxu0 0
    %129 = vmatprep.subr.bf16.mxu0 0
    %130 = vmatpush1.bf16.msra.mxu0 0
    %131 = vmatprep.subr.bf16.mxu0 0
    %132 = vmatpush1.bf16.msra.mxu0 0
    %133 = vmatprep.subr.bf16.mxu0 0
    %134 = vmatpush1.bf16.msra.mxu0 0
    %135 = vmatprep.subr.bf16.mxu0 0
    %136 = vmatpush1.bf16.msra.mxu0 0
    %137 = vmatprep.subr.bf16.mxu0 0
    %138 = vmatpush1.bf16.msra.mxu0 0
    %139 = vmatprep.subr.bf16.mxu0 0
    %140 = vmatpush1.bf16.msra.mxu0 0
    %141 = vmatprep.subr.bf16.mxu0 0
    %142 = vmatpush1.bf16.msra.mxu0 0
    %143 = vmatprep.subr.bf16.mxu0 0
    %144 = vmatpush1.bf16.msra.mxu0 0
    %145 = vmatprep.subr.bf16.mxu0 0
    %146 = vmatpush1.bf16.msra.mxu0 0
    %147 = vmatprep.mubr.bf16.mxu0 0
    %148 = vmatmul.mubr.bf16.gmra.mrb[0].mxu0 %v104
    %v149 = vpop.f32.mrb[0].mxu0
    %v150 = vadd.f32 0.0, %v149
    %v151 = vpop.f32.mrb[0].mxu0
    %v152 = vadd.f32 0.0, %v151
    %v153 = vpop.f32.mrb[0].mxu0
    %v154 = vadd.f32 0.0, %v153
    %v155 = vpop.f32.mrb[0].mxu0
    %v156 = vadd.f32 0.0, %v155
    %157 = vmatprep.mubr.bf16.mxu0 0
    %158 = vmatmul.mubr.bf16.gmra.mrb[0].mxu0 %v107
    %v159 = vpop.f32.mrb[0].mxu0
    %v160 = vadd.f32 0.0, %v159
    %v161 = vpop.f32.mrb[0].mxu0
    %v162 = vadd.f32 0.0, %v161
    %v163 = vpop.f32.mrb[0].mxu0
    %v164 = vadd.f32 0.0, %v163
    %v165 = vpop.f32.mrb[0].mxu0
    %v166 = vadd.f32 0.0, %v165
    %167 = vmatprep.mubr.bf16.mxu0 0
    %168 = vmatmul.mubr.bf16.gmra.mrb[0].mxu0 %v110
    %v169 = vpop.f32.mrb[0].mxu0
    %v170 = vadd.f32 0.0, %v169
    %v171 = vpop.f32.mrb[0].mxu0
    %v172 = vadd.f32 0.0, %v171
    %v173 = vpop.f32.mrb[0].mxu0
    %v174 = vadd.f32 0.0, %v173
    %v175 = vpop.f32.mrb[0].mxu0
    %v176 = vadd.f32 0.0, %v175
    %177 = vmatprep.mubr.bf16.mxu0 0
    %178 = vmatmul.mubr.bf16.gmra.mrb[0].mxu0 %v113
    %v179 = vpop.f32.mrb[0].mxu0
    %v180 = vadd.f32 0.0, %v179
    %v181 = vpop.f32.mrb[0].mxu0
    %v182 = vadd.f32 0.0, %v181
    %v183 = vpop.f32.mrb[0].mxu0
    %v184 = vadd.f32 0.0, %v183
    %v185 = vpop.f32.mrb[0].mxu0
    %v186 = vadd.f32 0.0, %v185
    %187 = vdwg.mxu0
    %v188 = vadd.f32 %v34, %v150
    %v189 = vadd.f32 %v35, %v152
    %v190 = vadd.f32 %v36, %v154
    %v191 = vadd.f32 %v37, %v156
    %v192 = vadd.f32 %v38, %v160
    %v193 = vadd.f32 %v39, %v162
    %v194 = vadd.f32 %v40, %v164
    %v195 = vadd.f32 %v41, %v166
    %v196 = vadd.f32 %v42, %v170
    %v197 = vadd.f32 %v43, %v172
    %v198 = vadd.f32 %v44, %v174
    %v199 = vadd.f32 %v45, %v176
    %v200 = vadd.f32 %v46, %v180
    %v201 = vadd.f32 %v47, %v182
    %v202 = vadd.f32 %v48, %v184
    %v203 = vadd.f32 %v49, %v186
    %204 = vst [vmem:[#allocation2] sm:$0xff] %v188
    %205 = vst.msk [vmem:[#allocation2 + $0x8] sm:$0xff] %vm102, %v189
    %206 = vst [vmem:[#allocation2 + $0x10] sm:$0xff] %v190
    %207 = vst.msk [vmem:[#allocation2 + $0x18] sm:$0xff] %vm102, %v191
    %208 = vst [vmem:[#allocation2 + $0x20] sm:$0xff] %v192
    %209 = vst.msk [vmem:[#allocation2 + $0x28] sm:$0xff] %vm102, %v193
    %210 = vst [vmem:[#allocation2 + $0x30] sm:$0xff] %v194
    %211 = vst.msk [vmem:[#allocation2 + $0x38] sm:$0xff] %vm102, %v195
    %212 = vst [vmem:[#allocation2 + $0x40] sm:$0xff] %v196
    %213 = vst.msk [vmem:[#allocation2 + $0x48] sm:$0xff] %vm102, %v197
    %214 = vst [vmem:[#allocation2 + $0x50] sm:$0xff] %v198
    %215 = vst.msk [vmem:[#allocation2 + $0x58] sm:$0xff] %vm102, %v199
    %216 = vst [vmem:[#allocation2 + $0x60] sm:$0xff] %v200
    %217 = vst.msk [vmem:[#allocation2 + $0x68] sm:$0xff] %vm102, %v201
    %218 = vst [vmem:[#allocation2 + $0x70] sm:$0xff] %v202
    %219 = vst.msk [vmem:[#allocation2 + $0x78] sm:$0xff] %vm102, %v203
    // Predicated region
    $region14: #{tpu_custom_call.1} parent=1 // pred_check
      %p220 = pneg %p13
    $region15: #{tpu_custom_call.1} parent=1 // pred_check_branch
      %222 = sbr.rel (%p220) target = $region17
    $region16: #{tpu_custom_call.1} parent=1 // pred_region
      %v223 = vld [vmem:[#allocation2] sm:$0xff]
      %v224 = vld [vmem:[#allocation2 + $0x8] sm:$0xff]
      %v225 = vld [vmem:[#allocation2 + $0x10] sm:$0xff]
      %v226 = vld [vmem:[#allocation2 + $0x18] sm:$0xff]
      %v227 = vld [vmem:[#allocation2 + $0x20] sm:$0xff]
      %v228 = vld [vmem:[#allocation2 + $0x28] sm:$0xff]
      %v229 = vld [vmem:[#allocation2 + $0x30] sm:$0xff]
      %v230 = vld [vmem:[#allocation2 + $0x38] sm:$0xff]
      %v231 = vld [vmem:[#allocation2 + $0x40] sm:$0xff]
      %v232 = vld [vmem:[#allocation2 + $0x48] sm:$0xff]
      %v233 = vld [vmem:[#allocation2 + $0x50] sm:$0xff]
      %v234 = vld [vmem:[#allocation2 + $0x58] sm:$0xff]
      %v235 = vld [vmem:[#allocation2 + $0x60] sm:$0xff]
      %v236 = vld [vmem:[#allocation2 + $0x68] sm:$0xff]
      %v237 = vld [vmem:[#allocation2 + $0x70] sm:$0xff]
      %v238 = vld [vmem:[#allocation2 + $0x78] sm:$0xff]
      %v239 = vpack.c.bf16 %v225, %v223
      %v240 = vpack.c.bf16 %v226, %v224
      %v241 = vpack.c.bf16 %v229, %v227
      %v242 = vpack.c.bf16 %v230, %v228
      %v243 = vpack.c.bf16 %v233, %v231
      %v244 = vpack.c.bf16 %v234, %v232
      %v245 = vpack.c.bf16 %v237, %v235
      %v246 = vpack.c.bf16 %v238, %v236
      %v255 = vunpack.c.l.b16 %v239
      %v256 = vunpack.c.l.b16 %v240
      %v257 = vunpack.c.h.b16 %v239
      %v258 = vunpack.c.h.b16 %v240
      %v259 = vunpack.c.l.b16 %v241
      %v260 = vunpack.c.l.b16 %v242
      %v261 = vunpack.c.h.b16 %v241
      %v262 = vunpack.c.h.b16 %v242
      %v263 = vunpack.c.l.b16 %v243
      %v264 = vunpack.c.l.b16 %v244
      %v265 = vunpack.c.h.b16 %v243
      %v266 = vunpack.c.h.b16 %v244
      %v267 = vunpack.c.l.b16 %v245
      %v268 = vunpack.c.l.b16 %v246
      %v269 = vunpack.c.h.b16 %v245
      %v270 = vunpack.c.h.b16 %v246
      %v271 = vpack.c.b16 %v256, %v255
      %v272 = vpack.c.b16 %v258, %v257
      %v273 = vpack.c.b16 %v260, %v259
      %v274 = vpack.c.b16 %v262, %v261
      %v275 = vpack.c.b16 %v264, %v263
      %v276 = vpack.c.b16 %v266, %v265
      %v277 = vpack.c.b16 %v268, %v267
      %v278 = vpack.c.b16 %v270, %v269
      %vm287 = vcmask 1043456
      %vm288 = vcmask 261124
      %vm289 = vmor %vm288, %vm287
      %290 = vst.msk [vmem:[#allocation3] sm:$0xff] %vm289, %v271
      %291 = vst.msk [vmem:[#allocation3 + $0x8] sm:$0xff] %vm289, %v272
      %292 = vst.msk [vmem:[#allocation3 + $0x10] sm:$0xff] %vm289, %v273
      %293 = vst.msk [vmem:[#allocation3 + $0x18] sm:$0xff] %vm289, %v274
      %294 = vst.msk [vmem:[#allocation3 + $0x20] sm:$0xff] %vm289, %v275
      %295 = vst.msk [vmem:[#allocation3 + $0x28] sm:$0xff] %vm289, %v276
      %296 = vst.msk [vmem:[#allocation3 + $0x30] sm:$0xff] %vm289, %v277
      %297 = vst.msk [vmem:[#allocation3 + $0x38] sm:$0xff] %vm289, %v278
    $region17: #{tpu_custom_call.1} parent=1 // pred_fallthru
      _
    // Predicated region
    $region18: #{tpu_custom_call.1} parent=1 // pred_check
      _
    $region19: #{tpu_custom_call.1} parent=1 // pred_check_branch
      %299 = sbr.rel (0) target = $region21
    $region20: #{tpu_custom_call.1} parent=1 // pred_region
      %s301 = ssub.s32 1024, 1024
      %302 = vsyncadd [#allocation4], %s301
      %s303 = sshll.u32 [#allocation3], 4
      %s304 = int_to_ptr.vmem [resolvable:$true] %s303
      %309 = dma.vmem_to_hbm [thread:$0]  %s304, 1024, %s2, [#allocation4], 128, 128, 8
    $region21: #{tpu_custom_call.1} parent=1 // pred_fallthru
      _
    // Predicated region
    $region22: #{tpu_custom_call.1} parent=1 // pred_check
      _
    $region23: #{tpu_custom_call.1} parent=1 // pred_check_branch
      %311 = sbr.rel (0) target = $region25
    $region24: #{tpu_custom_call.1} parent=1 // pred_region
      %312 = dma.done [#allocation4], 1024
    $region25: #{tpu_custom_call.1} parent=1 // pred_fallthru
      _
    %313 = vsyncpa [#allocation4], 1

</llo_original>
